<compile_context>
chip_gen: v6e
topology: v6e:2x2x1
jax: 0.10.0
libtpu: 0.0.40
codegen_flags: <defaults>
</compile_context>

<pallas_src>
import functools

import jax
import jax.numpy as jnp
from jax.experimental import pallas as pl
from jax.experimental.pallas import tpu as pltpu

D_IN = 768     # BERT hidden size
D_HID = 256    # fc_txt out features
D_OUT = 2      # fc_classif out features (real classes)
D_PAD = 128    # lane-dense padded class dimension

_MEGACORE_MIN_ROWS = 512   # force >=2 grid steps above this batch (v7x dual-TC)


def net_head_kernel(x_ref, w1_ref, b1_ref, w2_ref, b2_ref, o_ref):
    # x_ref:  (tb, 768)  f32       w1_ref: (768, 256) bf16    b1_ref: (1, 256) f32
    # w2_ref: (256, 128) bf16      b2_ref: (1, 128)   f32     o_ref:  (tb, 128) bf16
    # In-kernel bf16 cast of x (VPU, overlapped with DMA); f32 accumulation on MXU.
    x = x_ref[...].astype(jnp.bfloat16)

    # fc_txt + ReLU (elementwise math stays in f32)
    h = jnp.dot(x, w1_ref[...], preferred_element_type=jnp.float32)
    h = jnp.maximum(h + b1_ref[...], 0.0)

    # fc_classif with lane-dense (padded to 128) output columns.
    logits = jnp.dot(h.astype(jnp.bfloat16), w2_ref[...],
                     preferred_element_type=jnp.float32) + b2_ref[...]

    # Softmax over the padded class axis; padded lanes carry bias -1e30 and their
    # weight columns are zero, so exp underflows to 0 and they do not contribute.
    m = jnp.max(logits, axis=-1, keepdims=True)
    e = jnp.exp(logits - m)
    denom = jnp.sum(e, axis=-1, keepdims=True)
    o_ref[...] = (e * pl.reciprocal(denom, approx=True)).astype(o_ref.dtype)


def prepare_params(w1, b1, w2, b2):
    """One-time prep: transpose, pad to lane-dense classes, cast MXU operands to bf16.
    w1: [256,768], b1: [256], w2: [2,256], b2: [2] (PyTorch nn.Linear [out,in])."""
    w1_t = jnp.asarray(w1, jnp.float32).T.astype(jnp.bfloat16)            # (768, 256)
    b1_r = jnp.asarray(b1, jnp.float32).reshape(1, D_HID)                 # (1, 256)
    w2_t = jnp.asarray(w2, jnp.float32).T                                 # (256, 2)
    w2_p = (jnp.zeros((D_HID, D_PAD), jnp.float32)
            .at[:, :D_OUT].set(w2_t).astype(jnp.bfloat16))                # (256, 128)
    b2_p = (jnp.full((1, D_PAD), -1e30, jnp.float32)
            .at[0, :D_OUT].set(jnp.asarray(b2, jnp.float32)))             # (1, 128)
    return w1_t, b1_r, w2_p, b2_p


def _round_up(x, m):
    return (x + m - 1) // m * m


def _cdiv(a, b):
    return (a + b - 1) // b


def _choose_tiling(batch, tb_max):
    """Size the row tile from the step count so padding is at most steps*7 rows.
    (8-row alignment chosen over 256: in the memory-bound regime, avoiding up to
    255 padded rows per step beats marginal MXU M-occupancy gains.)"""
    steps = max(1, _cdiv(batch, tb_max))
    # Give the 'parallel' batch axis >= 2 steps when there is enough work, so both
    # TensorCores are used on v7x (near-free on single-TC chips).
    if steps == 1 and batch >= _MEGACORE_MIN_ROWS:
        steps = 2
    tb = _round_up(_cdiv(batch, steps), 8)
    b_pad = steps * tb
    return tb, b_pad, steps


def _vmem_limit_bytes(tb):
    # Double-buffered x (f32) + out (bf16) tiles, double-buffered resident weights.
    x_buf = 2 * tb * D_IN * 4
    out_buf = 2 * tb * D_PAD * 2
    w_buf = 2 * (D_IN * D_HID * 2 + D_HID * 4 + D_HID * D_PAD * 2 + D_PAD * 4)
    need = x_buf + out_buf + w_buf + (4 << 20)      # headroom
    return min(max(need, 16 << 20), 48 << 20)       # stay under v7x's 64 MiB VMEM


@functools.partial(jax.jit, static_argnames=("tb_max",))
def net_forward(x, params, *, tb_max=2048):
    """x: [B, 768] float32.  params: output of prepare_params.  Returns [B, 2] f32 probs."""
    w1_t, b1_r, w2_p, b2_p = params
    B = x.shape[0]

    tb, b_pad, steps = _choose_tiling(B, tb_max)
    if b_pad != B:
        x = jnp.pad(x, ((0, b_pad - B), (0, 0)))

    out = pl.pallas_call(
        net_head_kernel,
        out_shape=jax.ShapeDtypeStruct((b_pad, D_PAD), jnp.bfloat16),
        grid_spec=pltpu.PrefetchScalarGridSpec(
            num_scalar_prefetch=0,
            grid=(steps,),
            in_specs=[
                pl.BlockSpec((tb, D_IN), lambda i: (i, 0)),       # x tile (f32, cast in kernel)
                pl.BlockSpec((D_IN, D_HID), lambda i: (0, 0)),    # W1 (resident)
                pl.BlockSpec((1, D_HID), lambda i: (0, 0)),       # b1
                pl.BlockSpec((D_HID, D_PAD), lambda i: (0, 0)),   # W2 (padded, resident)
                pl.BlockSpec((1, D_PAD), lambda i: (0, 0)),       # b2 (padded)
            ],
            out_specs=pl.BlockSpec((tb, D_PAD), lambda i: (i, 0)),
        ),
        compiler_params=pltpu.CompilerParams(
            dimension_semantics=("parallel",),
            vmem_limit_bytes=_vmem_limit_bytes(tb)),
    )(x, w1_t, b1_r, w2_p, b2_p)

    return out[:B, :D_OUT].astype(jnp.float32)


def _init_linear(key, out_f, in_f):
    # Deterministic init mimicking torch.nn.Linear default (uniform +/- 1/sqrt(fan_in))
    kw, kb = jax.random.split(key)
    bound = 1.0 / jnp.sqrt(jnp.float32(in_f))
    w = jax.random.uniform(kw, (out_f, in_f), jnp.float32, -bound, bound)
    b = jax.random.uniform(kb, (out_f,), jnp.float32, -bound, bound)
    return w, b


if __name__ == "__main__":
    key = jax.random.PRNGKey(0)
    k_x, k_fc1, k_fc2 = jax.random.split(key, 3)

    B = 8  # small batch of sentence embeddings
    x = jax.random.normal(k_x, (B, D_IN), jnp.float32)  # stand-in for BERT [CLS] output

    w1, b1 = _init_linear(k_fc1, D_HID, D_IN)   # fc_txt:     Linear(768, 256)
    w2, b2 = _init_linear(k_fc2, D_OUT, D_HID)  # fc_classif: Linear(256, 2)

    params = prepare_params(w1, b1, w2, b2)     # one-time weight prep (hoisted)
    out = net_forward(x, params)
    out = jax.block_until_ready(out)

    # Pure-JAX f32 reference (kernel uses bf16 matmul inputs + bf16 output -> relaxed tol).
    h_ref = jnp.maximum(x @ w1.T + b1, 0.0)
    logits_ref = h_ref @ w2.T + b2
    ref = jax.nn.softmax(logits_ref, axis=1)

    assert out.shape == (B, D_OUT)
    assert jnp.allclose(out, ref, atol=2e-2, rtol=2e-2), "mismatch vs reference"
    assert jnp.allclose(jnp.sum(out, axis=1), 1.0, atol=2e-2), "softmax rows must sum to 1"

    print("KERNEL_OK")
</pallas_src>

<mosaic_0001>
module attributes {stable_mosaic.version = 11 : i64} {
  func.func @net_head_kernel(%arg0: i32, %arg1: memref<8x768xf32, #tpu.memory_space<vmem>>, %arg2: memref<768x256xbf16, #tpu.memory_space<vmem>>, %arg3: memref<1x256xf32, #tpu.memory_space<vmem>>, %arg4: memref<256x128xbf16, #tpu.memory_space<vmem>>, %arg5: memref<1x128xf32, #tpu.memory_space<vmem>>, %arg6: memref<8x128xbf16, #tpu.memory_space<vmem>>) attributes {dimension_semantics = [#tpu.dimension_semantics<parallel>], iteration_bounds = array<i64: 1>, scalar_prefetch = 0 : i64, scratch_operands = 0 : i64, tpu.core_type = #tpu.core_type<tc>, window_params = [{transform_indices = @transform_0, window_bounds = array<i64: 8, 768>}, {pipeline_mode = #tpu.pipeline_mode<synchronous>, transform_indices = @transform_1, window_bounds = array<i64: 768, 256>}, {pipeline_mode = #tpu.pipeline_mode<synchronous>, transform_indices = @transform_2, window_bounds = array<i64: 1, 256>}, {pipeline_mode = #tpu.pipeline_mode<synchronous>, transform_indices = @transform_3, window_bounds = array<i64: 256, 128>}, {pipeline_mode = #tpu.pipeline_mode<synchronous>, transform_indices = @transform_4, window_bounds = array<i64: 1, 128>}, {transform_indices = @transform_5, window_bounds = array<i64: 8, 128>}]} {
    %c0 = arith.constant 0 : index
    %c0_0 = arith.constant 0 : index
    %0 = vector.load %arg1[%c0, %c0_0] : memref<8x768xf32, #tpu.memory_space<vmem>>, vector<8x768xf32>
    %1 = arith.truncf %0 : vector<8x768xf32> to vector<8x768xbf16>
    %c0_1 = arith.constant 0 : index
    %c0_2 = arith.constant 0 : index
    %2 = vector.load %arg2[%c0_1, %c0_2] : memref<768x256xbf16, #tpu.memory_space<vmem>>, vector<768x256xbf16>
    %cst = arith.constant dense<0.000000e+00> : vector<8x256xf32>
    %3 = tpu.matmul %1, %2, %cst {dimension_numbers = #tpu.dot_dimension_numbers<[1], [0], [0], [1], [0, 0, 1, 1], [], []>} : vector<8x768xbf16>, vector<768x256xbf16>, vector<8x256xf32> -> vector<8x256xf32>
    %c0_3 = arith.constant 0 : index
    %c0_4 = arith.constant 0 : index
    %4 = vector.load %arg3[%c0_3, %c0_4] : memref<1x256xf32, #tpu.memory_space<vmem>>, vector<1x256xf32>
    %5 = vector.broadcast %4 : vector<1x256xf32> to vector<8x256xf32>
    %6 = arith.addf %3, %5 : vector<8x256xf32>
    %cst_5 = arith.constant 0.000000e+00 : f32
    %7 = vector.broadcast %cst_5 : f32 to vector<8x256xf32>
    %8 = arith.maximumf %6, %7 : vector<8x256xf32>
    %9 = arith.truncf %8 : vector<8x256xf32> to vector<8x256xbf16>
    %c0_6 = arith.constant 0 : index
    %c0_7 = arith.constant 0 : index
    %10 = vector.load %arg4[%c0_6, %c0_7] : memref<256x128xbf16, #tpu.memory_space<vmem>>, vector<256x128xbf16>
    %cst_8 = arith.constant dense<0.000000e+00> : vector<8x128xf32>
    %11 = tpu.matmul %9, %10, %cst_8 {dimension_numbers = #tpu.dot_dimension_numbers<[1], [0], [0], [1], [0, 0, 1, 1], [], []>} : vector<8x256xbf16>, vector<256x128xbf16>, vector<8x128xf32> -> vector<8x128xf32>
    %c0_9 = arith.constant 0 : index
    %c0_10 = arith.constant 0 : index
    %12 = vector.load %arg5[%c0_9, %c0_10] : memref<1x128xf32, #tpu.memory_space<vmem>>, vector<1x128xf32>
    %13 = vector.broadcast %12 : vector<1x128xf32> to vector<8x128xf32>
    %14 = arith.addf %11, %13 : vector<8x128xf32>
    %cst_11 = arith.constant dense<0xFF800000> : vector<8xf32>
    %15 = vector.multi_reduction <maximumf>, %14, %cst_11 [1] : vector<8x128xf32> to vector<8xf32>
    %16 = vector.shape_cast %15 : vector<8xf32> to vector<8x1xf32>
    %17 = vector.broadcast %16 : vector<8x1xf32> to vector<8x128xf32>
    %18 = arith.subf %14, %17 : vector<8x128xf32>
    %19 = math.exp %18 : vector<8x128xf32>
    %cst_12 = arith.constant dense<0.000000e+00> : vector<8xf32>
    %20 = vector.multi_reduction <add>, %19, %cst_12 [1] : vector<8x128xf32> to vector<8xf32>
    %21 = vector.shape_cast %20 : vector<8xf32> to vector<8x1xf32>
    %22 = tpu.reciprocal %21 {approx = true} : vector<8x1xf32> -> vector<8x1xf32>
    %23 = vector.broadcast %22 : vector<8x1xf32> to vector<8x128xf32>
    %24 = arith.mulf %19, %23 : vector<8x128xf32>
    %25 = arith.truncf %24 : vector<8x128xf32> to vector<8x128xbf16>
    %c0_13 = arith.constant 0 : index
    %c0_14 = arith.constant 0 : index
    %26 = vector.load %arg6[%c0_13, %c0_14] : memref<8x128xbf16, #tpu.memory_space<vmem>>, vector<8x128xbf16>
    tpu.vector_store %arg6[%c0_13, %c0_14], %25 {strides = array<i32>} : memref<8x128xbf16, #tpu.memory_space<vmem>>, vector<8x128xbf16>,
    return
  }
  func.func @transform_0(%arg0: i32) -> (i32, i32) {
    %c0_i32 = arith.constant 0 : i32
    %c0_i32_0 = arith.constant 0 : i32
    return %arg0, %c0_i32 : i32, i32
  }
  func.func @transform_1(%arg0: i32) -> (i32, i32) {
    %c0_i32 = arith.constant 0 : i32
    %c0_i32_0 = arith.constant 0 : i32
    %c0_i32_1 = arith.constant 0 : i32
    return %c0_i32, %c0_i32_0 : i32, i32
  }
  func.func @transform_2(%arg0: i32) -> (i32, i32) {
    %c0_i32 = arith.constant 0 : i32
    %c0_i32_0 = arith.constant 0 : i32
    %c0_i32_1 = arith.constant 0 : i32
    return %c0_i32, %c0_i32_0 : i32, i32
  }
  func.func @transform_3(%arg0: i32) -> (i32, i32) {
    %c0_i32 = arith.constant 0 : i32
    %c0_i32_0 = arith.constant 0 : i32
    %c0_i32_1 = arith.constant 0 : i32
    return %c0_i32, %c0_i32_0 : i32, i32
  }
  func.func @transform_4(%arg0: i32) -> (i32, i32) {
    %c0_i32 = arith.constant 0 : i32
    %c0_i32_0 = arith.constant 0 : i32
    %c0_i32_1 = arith.constant 0 : i32
    return %c0_i32, %c0_i32_0 : i32, i32
  }
  func.func @transform_5(%arg0: i32) -> (i32, i32) {
    %c0_i32 = arith.constant 0 : i32
    %c0_i32_0 = arith.constant 0 : i32
    return %arg0, %c0_i32 : i32, i32
  }
}

</mosaic_0001>

<llo_original>
// kernel: net_forward.1
$region0: #{net_forward.1}
  #allocation0 [shape = 'u32[]', space=smem, size = 0x4, offset = 0x4, fixed_abs, tag = 'smem constant byte address 0x4 - core index']
  #allocation1 [shape = 'u32[144,128]{1,0:T(1,128)}', space=vmem, size = 0x12000, scoped, tag = 'internal scratch']
  %s0 = inlined_call_operand.hbm [shape: f32[8,768], index: 0, kind: input, shape index: {}]
  %s1 = inlined_call_operand.hbm [shape: bf16[768,256], index: 1, kind: input, shape index: {}]
  %s2 = inlined_call_operand.vmem [shape: f32[1,256], index: 2, kind: input, shape index: {}]
  %s3 = inlined_call_operand.hbm [shape: bf16[256,128], index: 3, kind: input, shape index: {}]
  %s4 = inlined_call_operand.vmem [shape: f32[1,128], index: 4, kind: input, shape index: {}]
  %s5 = inlined_call_operand.vmem [shape: bf16[8,128], index: 5, kind: output, shape index: {}]
  %s6 = sld [smem:[#allocation0]]
  $region42: #{net_forward.1} parent=0
    _
  %s8 = ssub.s32 1, %s6
  %s9 = scalar_select 0, %s8, %s6
  $region1: #{net_forward.1} parent=0
    #allocation2 [shape = 'u8[24576]{0}', space=vmem, size = 0x6000, scoped, tag = 'input window, operand 0, single buffered']
    #allocation3 [shape = 's32[1]{0}', space=sflag, size = 0x4, scoped, tag = 'scoped memory for net_forward.1']
    #allocation4 [shape = 'u8[393216]{0}', space=vmem, size = 0x60000, scoped, tag = 'input window, operand 1, single buffered']
    #allocation5 [shape = 's32[1]{0}', space=sflag, size = 0x4, scoped, tag = 'scoped memory for net_forward.1']
    #allocation6 [shape = 'u8[65536]{0}', space=vmem, size = 0x10000, scoped, tag = 'input window, operand 3, single buffered']
    %10 = vsyncpa [#allocation3], 0
    %11 = vsyncpa [#allocation5], 0
    // Predicated region
    $region2: #{net_forward.1} parent=1 // pred_check
      _
    $region3: #{net_forward.1} parent=1 // pred_check_branch
      %13 = sbr.rel (0) target = $region5
    $region4: #{net_forward.1} parent=1 // pred_region
      %s15 = ssub.s32 768, 768
      %16 = vsyncadd [#allocation3], %s15
      %s18 = sshll.u32 [#allocation2], 4
      %s19 = int_to_ptr.vmem [resolvable:$true] %s18
      %21 = dma.hbm_to_vmem [thread:$0]  %s0, 768, %s19, [#allocation3]
    $region5: #{net_forward.1} parent=1 // pred_fallthru
      _
    // Predicated region
    $region6: #{net_forward.1} parent=1 // pred_check
      _
    $region7: #{net_forward.1} parent=1 // pred_check_branch
      %23 = sbr.rel (0) target = $region9
    $region8: #{net_forward.1} parent=1 // pred_region
      %s25 = ssub.s32 12288, 12288
      %26 = vsyncadd [#allocation5], %s25
      %s27 = sshll.u32 [#allocation4], 4
      %s28 = int_to_ptr.vmem [resolvable:$true] %s27
      %33 = dma.hbm_to_vmem [thread:$0]  %s1, 12288, %s28, [#allocation5], 128, 128, 8
    $region9: #{net_forward.1} parent=1 // pred_fallthru
      _
    // Predicated region
    $region10: #{net_forward.1} parent=1 // pred_check
      _
    $region11: #{net_forward.1} parent=1 // pred_check_branch
      %35 = sbr.rel (0) target = $region13
    $region12: #{net_forward.1} parent=1 // pred_region
      _
    $region13: #{net_forward.1} parent=1 // pred_fallthru
      _
    // Predicated region
    $region14: #{net_forward.1} parent=1 // pred_check
      _
    $region15: #{net_forward.1} parent=1 // pred_check_branch
      %37 = sbr.rel (0) target = $region17
    $region16: #{net_forward.1} parent=1 // pred_region
      %s39 = ssub.s32 2048, 2048
      %40 = vsyncadd [#allocation5], %s39
      %s41 = sshll.u32 [#allocation6], 4
      %s42 = int_to_ptr.vmem [resolvable:$true] %s41
      %47 = dma.hbm_to_vmem [thread:$0]  %s3, 2048, %s42, [#allocation5], 64, 64, 4
    $region17: #{net_forward.1} parent=1 // pred_fallthru
      _
    // Predicated region
    $region18: #{net_forward.1} parent=1 // pred_check
      _
    $region19: #{net_forward.1} parent=1 // pred_check_branch
      %49 = sbr.rel (0) target = $region21
    $region20: #{net_forward.1} parent=1 // pred_region
      _
    $region21: #{net_forward.1} parent=1 // pred_fallthru
      _
    // Predicated region
    $region22: #{net_forward.1} parent=1 // pred_check
      _
    $region23: #{net_forward.1} parent=1 // pred_check_branch
      %51 = sbr.rel (0) target = $region25
    $region24: #{net_forward.1} parent=1 // pred_region
      %52 = dma.done [#allocation3], 768
    $region25: #{net_forward.1} parent=1 // pred_fallthru
      _
    // Predicated region
    $region26: #{net_forward.1} parent=1 // pred_check
      _
    $region27: #{net_forward.1} parent=1 // pred_check_branch
      %54 = sbr.rel (0) target = $region29
    $region28: #{net_forward.1} parent=1 // pred_region
      %55 = dma.done [#allocation5], 12288
    $region29: #{net_forward.1} parent=1 // pred_fallthru
      _
    // Predicated region
    $region30: #{net_forward.1} parent=1 // pred_check
      _
    $region31: #{net_forward.1} parent=1 // pred_check_branch
      %57 = sbr.rel (0) target = $region33
    $region32: #{net_forward.1} parent=1 // pred_region
      %58 = dma.done [#allocation5], 2048
    $region33: #{net_forward.1} parent=1 // pred_fallthru
      _
    %v60 = vld [vmem:[#allocation2] sm:$0xff]
    %v61 = vld [vmem:[#allocation2 + $0x8] sm:$0xff]
    %v62 = vld [vmem:[#allocation2 + $0x10] sm:$0xff]
    %v63 = vld [vmem:[#allocation2 + $0x18] sm:$0xff]
    %v64 = vld [vmem:[#allocation2 + $0x20] sm:$0xff]
    %v65 = vld [vmem:[#allocation2 + $0x28] sm:$0xff]
    %v66 = vpack.c.bf16 %v60, %v60
    %v67 = vpack.c.bf16 %v61, %v61
    %v68 = vpack.c.bf16 %v62, %v62
    %v69 = vpack.c.bf16 %v63, %v63
    %v70 = vpack.c.bf16 %v64, %v64
    %v71 = vpack.c.bf16 %v65, %v65
    %v72 = vld [vmem:[#allocation4] sm:$0xff]
    %v73 = vld [vmem:[#allocation4 + $0x8] sm:$0xff]
    %v74 = vld [vmem:[#allocation4 + $0x10] sm:$0xff]
    %v75 = vld [vmem:[#allocation4 + $0x18] sm:$0xff]
    %v76 = vld [vmem:[#allocation4 + $0x20] sm:$0xff]
    %v77 = vld [vmem:[#allocation4 + $0x28] sm:$0xff]
    %v78 = vld [vmem:[#allocation4 + $0x30] sm:$0xff]
    %v79 = vld [vmem:[#allocation4 + $0x38] sm:$0xff]
    %v80 = vld [vmem:[#allocation4 + $0x40] sm:$0xff]
    %v81 = vld [vmem:[#allocation4 + $0x48] sm:$0xff]
    %v82 = vld [vmem:[#allocation4 + $0x50] sm:$0xff]
    %v83 = vld [vmem:[#allocation4 + $0x58] sm:$0xff]
    %v84 = vld [vmem:[#allocation4 + $0x60] sm:$0xff]
    %v85 = vld [vmem:[#allocation4 + $0x68] sm:$0xff]
    %v86 = vld [vmem:[#allocation4 + $0x70] sm:$0xff]
    %v87 = vld [vmem:[#allocation4 + $0x78] sm:$0xff]
    %v88 = vld [vmem:[#allocation4 + $0x80] sm:$0xff]
    %v89 = vld [vmem:[#allocation4 + $0x88] sm:$0xff]
    %v90 = vld [vmem:[#allocation4 + $0x90] sm:$0xff]
    %v91 = vld [vmem:[#allocation4 + $0x98] sm:$0xff]
    %v92 = vld [vmem:[#allocation4 + $0xa0] sm:$0xff]
    %v93 = vld [vmem:[#allocation4 + $0xa8] sm:$0xff]
    %v94 = vld [vmem:[#allocation4 + $0xb0] sm:$0xff]
    %v95 = vld [vmem:[#allocation4 + $0xb8] sm:$0xff]
    %v96 = vld [vmem:[#allocation4 + $0xc0] sm:$0xff]
    %v97 = vld [vmem:[#allocation4 + $0xc8] sm:$0xff]
    %v98 = vld [vmem:[#allocation4 + $0xd0] sm:$0xff]
    %v99 = vld [vmem:[#allocation4 + $0xd8] sm:$0xff]
    %v100 = vld [vmem:[#allocation4 + $0xe0] sm:$0xff]
    %v101 = vld [vmem:[#allocation4 + $0xe8] sm:$0xff]
    %v102 = vld [vmem:[#allocation4 + $0xf0] sm:$0xff]
    %v103 = vld [vmem:[#allocation4 + $0xf8] sm:$0xff]
    %v104 = vld [vmem:[#allocation4 + $0x100] sm:$0xff]
    %v105 = vld [vmem:[#allocation4 + $0x108] sm:$0xff]
    %v106 = vld [vmem:[#allocation4 + $0x110] sm:$0xff]
    %v107 = vld [vmem:[#allocation4 + $0x118] sm:$0xff]
    %v108 = vld [vmem:[#allocation4 + $0x120] sm:$0xff]
    %v109 = vld [vmem:[#allocation4 + $0x128] sm:$0xff]
    %v110 = vld [vmem:[#allocation4 + $0x130] sm:$0xff]
    %v111 = vld [vmem:[#allocation4 + $0x138] sm:$0xff]
    %v112 = vld [vmem:[#allocation4 + $0x140] sm:$0xff]
    %v113 = vld [vmem:[#allocation4 + $0x148] sm:$0xff]
    %v114 = vld [vmem:[#allocation4 + $0x150] sm:$0xff]
    %v115 = vld [vmem:[#allocation4 + $0x158] sm:$0xff]
    %v116 = vld [vmem:[#allocation4 + $0x160] sm:$0xff]
    %v117 = vld [vmem:[#allocation4 + $0x168] sm:$0xff]
    %v118 = vld [vmem:[#allocation4 + $0x170] sm:$0xff]
    %v119 = vld [vmem:[#allocation4 + $0x178] sm:$0xff]
    %v120 = vld [vmem:[#allocation4 + $0x180] sm:$0xff]
    %v121 = vld [vmem:[#allocation4 + $0x188] sm:$0xff]
    %v122 = vld [vmem:[#allocation4 + $0x190] sm:$0xff]
    %v123 = vld [vmem:[#allocation4 + $0x198] sm:$0xff]
    %v124 = vld [vmem:[#allocation4 + $0x1a0] sm:$0xff]
    %v125 = vld [vmem:[#allocation4 + $0x1a8] sm:$0xff]
    %v126 = vld [vmem:[#allocation4 + $0x1b0] sm:$0xff]
    %v127 = vld [vmem:[#allocation4 + $0x1b8] sm:$0xff]
    %v128 = vld [vmem:[#allocation4 + $0x1c0] sm:$0xff]
    %v129 = vld [vmem:[#allocation4 + $0x1c8] sm:$0xff]
    %v130 = vld [vmem:[#allocation4 + $0x1d0] sm:$0xff]
    %v131 = vld [vmem:[#allocation4 + $0x1d8] sm:$0xff]
    %v132 = vld [vmem:[#allocation4 + $0x1e0] sm:$0xff]
    %v133 = vld [vmem:[#allocation4 + $0x1e8] sm:$0xff]
    %v134 = vld [vmem:[#allocation4 + $0x1f0] sm:$0xff]
    %v135 = vld [vmem:[#allocation4 + $0x1f8] sm:$0xff]
    %v136 = vld [vmem:[#allocation4 + $0x200] sm:$0xff]
    %v137 = vld [vmem:[#allocation4 + $0x208] sm:$0xff]
    %v138 = vld [vmem:[#allocation4 + $0x210] sm:$0xff]
    %v139 = vld [vmem:[#allocation4 + $0x218] sm:$0xff]
    %v140 = vld [vmem:[#allocation4 + $0x220] sm:$0xff]
    %v141 = vld [vmem:[#allocation4 + $0x228] sm:$0xff]
    %v142 = vld [vmem:[#allocation4 + $0x230] sm:$0xff]
    %v143 = vld [vmem:[#allocation4 + $0x238] sm:$0xff]
    %v144 = vld [vmem:[#allocation4 + $0x240] sm:$0xff]
    %v145 = vld [vmem:[#allocation4 + $0x248] sm:$0xff]
    %v146 = vld [vmem:[#allocation4 + $0x250] sm:$0xff]
    %v147 = vld [vmem:[#allocation4 + $0x258] sm:$0xff]
    %v148 = vld [vmem:[#allocation4 + $0x260] sm:$0xff]
    %v149 = vld [vmem:[#allocation4 + $0x268] sm:$0xff]
    %v150 = vld [vmem:[#allocation4 + $0x270] sm:$0xff]
    %v151 = vld [vmem:[#allocation4 + $0x278] sm:$0xff]
    %v152 = vld [vmem:[#allocation4 + $0x280] sm:$0xff]
    %v153 = vld [vmem:[#allocation4 + $0x288] sm:$0xff]
    %v154 = vld [vmem:[#allocation4 + $0x290] sm:$0xff]
    %v155 = vld [vmem:[#allocation4 + $0x298] sm:$0xff]
    %v156 = vld [vmem:[#allocation4 + $0x2a0] sm:$0xff]
    %v157 = vld [vmem:[#allocation4 + $0x2a8] sm:$0xff]
    %v158 = vld [vmem:[#allocation4 + $0x2b0] sm:$0xff]
    %v159 = vld [vmem:[#allocation4 + $0x2b8] sm:$0xff]
    %v160 = vld [vmem:[#allocation4 + $0x2c0] sm:$0xff]
    %v161 = vld [vmem:[#allocation4 + $0x2c8] sm:$0xff]
    %v162 = vld [vmem:[#allocation4 + $0x2d0] sm:$0xff]
    %v163 = vld [vmem:[#allocation4 + $0x2d8] sm:$0xff]
    %v164 = vld [vmem:[#allocation4 + $0x2e0] sm:$0xff]
    %v165 = vld [vmem:[#allocation4 + $0x2e8] sm:$0xff]
    %v166 = vld [vmem:[#allocation4 + $0x2f0] sm:$0xff]
    %v167 = vld [vmem:[#allocation4 + $0x2f8] sm:$0xff]
    %v168 = vld [vmem:[%s2] sm:$0x3]
    %v170 = vlaneseq
    %v171 = vshrl.u32 %v170, 7
    %v172 = vsub.s32 0, %v171
    %v173 = vrot.slane %v168, %v172
    %v174 = vlaneseq
    %v175 = vshrl.u32 %v174, 7
    %v176 = vsub.s32 1, %v175
    %v177 = vrot.slane %v168, %v176
    %v276 = vunpack.c.l.b16 %v72
    %v277 = vunpack.c.h.b16 %v72
    %v278 = vunpack.c.l.b16 %v73
    %v279 = vunpack.c.h.b16 %v73
    %v280 = vunpack.c.l.b16 %v74
    %v281 = vunpack.c.h.b16 %v74
    %v282 = vunpack.c.l.b16 %v75
    %v283 = vunpack.c.h.b16 %v75
    %v284 = vunpack.c.l.b16 %v76
    %v285 = vunpack.c.h.b16 %v76
    %v286 = vunpack.c.l.b16 %v77
    %v287 = vunpack.c.h.b16 %v77
    %v288 = vunpack.c.l.b16 %v78
    %v289 = vunpack.c.h.b16 %v78
    %v290 = vunpack.c.l.b16 %v79
    %v291 = vunpack.c.h.b16 %v79
    %v292 = vunpack.c.l.b16 %v80
    %v293 = vunpack.c.h.b16 %v80
    %v294 = vunpack.c.l.b16 %v81
    %v295 = vunpack.c.h.b16 %v81
    %v296 = vunpack.c.l.b16 %v82
    %v297 = vunpack.c.h.b16 %v82
    %v298 = vunpack.c.l.b16 %v83
    %v299 = vunpack.c.h.b16 %v83
    %v300 = vunpack.c.l.b16 %v84
    %v301 = vunpack.c.h.b16 %v84
    %v302 = vunpack.c.l.b16 %v85
    %v303 = vunpack.c.h.b16 %v85
    %v304 = vunpack.c.l.b16 %v86
    %v305 = vunpack.c.h.b16 %v86
    %v306 = vunpack.c.l.b16 %v87
    %v307 = vunpack.c.h.b16 %v87
    %v308 = vunpack.c.l.b16 %v88
    %v309 = vunpack.c.h.b16 %v88
    %v310 = vunpack.c.l.b16 %v89
    %v311 = vunpack.c.h.b16 %v89
    %v312 = vunpack.c.l.b16 %v90
    %v313 = vunpack.c.h.b16 %v90
    %v314 = vunpack.c.l.b16 %v91
    %v315 = vunpack.c.h.b16 %v91
    %v316 = vunpack.c.l.b16 %v92
    %v317 = vunpack.c.h.b16 %v92
    %v318 = vunpack.c.l.b16 %v93
    %v319 = vunpack.c.h.b16 %v93
    %v320 = vunpack.c.l.b16 %v94
    %v321 = vunpack.c.h.b16 %v94
    %v322 = vunpack.c.l.b16 %v95
    %v323 = vunpack.c.h.b16 %v95
    %v324 = vunpack.c.l.b16 %v96
    %v325 = vunpack.c.h.b16 %v96
    %v326 = vunpack.c.l.b16 %v97
    %v327 = vunpack.c.h.b16 %v97
    %v328 = vunpack.c.l.b16 %v98
    %v329 = vunpack.c.h.b16 %v98
    %v330 = vunpack.c.l.b16 %v99
    %v331 = vunpack.c.h.b16 %v99
    %v332 = vunpack.c.l.b16 %v100
    %v333 = vunpack.c.h.b16 %v100
    %v334 = vunpack.c.l.b16 %v101
    %v335 = vunpack.c.h.b16 %v101
    %v336 = vunpack.c.l.b16 %v102
    %v337 = vunpack.c.h.b16 %v102
    %v338 = vunpack.c.l.b16 %v103
    %v339 = vunpack.c.h.b16 %v103
    %v340 = vunpack.c.l.b16 %v104
    %v341 = vunpack.c.h.b16 %v104
    %v342 = vunpack.c.l.b16 %v105
    %v343 = vunpack.c.h.b16 %v105
    %v344 = vunpack.c.l.b16 %v106
    %v345 = vunpack.c.h.b16 %v106
    %v346 = vunpack.c.l.b16 %v107
    %v347 = vunpack.c.h.b16 %v107
    %v348 = vunpack.c.l.b16 %v108
    %v349 = vunpack.c.h.b16 %v108
    %v350 = vunpack.c.l.b16 %v109
    %v351 = vunpack.c.h.b16 %v109
    %v352 = vunpack.c.l.b16 %v110
    %v353 = vunpack.c.h.b16 %v110
    %v354 = vunpack.c.l.b16 %v111
    %v355 = vunpack.c.h.b16 %v111
    %v356 = vunpack.c.l.b16 %v112
    %v357 = vunpack.c.h.b16 %v112
    %v358 = vunpack.c.l.b16 %v113
    %v359 = vunpack.c.h.b16 %v113
    %v360 = vunpack.c.l.b16 %v114
    %v361 = vunpack.c.h.b16 %v114
    %v362 = vunpack.c.l.b16 %v115
    %v363 = vunpack.c.h.b16 %v115
    %v364 = vunpack.c.l.b16 %v116
    %v365 = vunpack.c.h.b16 %v116
    %v366 = vunpack.c.l.b16 %v117
    %v367 = vunpack.c.h.b16 %v117
    %v368 = vunpack.c.l.b16 %v118
    %v369 = vunpack.c.h.b16 %v118
    %v370 = vunpack.c.l.b16 %v119
    %v371 = vunpack.c.h.b16 %v119
    %v372 = vunpack.c.l.b16 %v120
    %v373 = vunpack.c.h.b16 %v120
    %v374 = vunpack.c.l.b16 %v121
    %v375 = vunpack.c.h.b16 %v121
    %v376 = vunpack.c.l.b16 %v122
    %v377 = vunpack.c.h.b16 %v122
    %v378 = vunpack.c.l.b16 %v123
    %v379 = vunpack.c.h.b16 %v123
    %v380 = vunpack.c.l.b16 %v124
    %v381 = vunpack.c.h.b16 %v124
    %v382 = vunpack.c.l.b16 %v125
    %v383 = vunpack.c.h.b16 %v125
    %v384 = vunpack.c.l.b16 %v126
    %v385 = vunpack.c.h.b16 %v126
    %v386 = vunpack.c.l.b16 %v127
    %v387 = vunpack.c.h.b16 %v127
    %v388 = vunpack.c.l.b16 %v128
    %v389 = vunpack.c.h.b16 %v128
    %v390 = vunpack.c.l.b16 %v129
    %v391 = vunpack.c.h.b16 %v129
    %v392 = vunpack.c.l.b16 %v130
    %v393 = vunpack.c.h.b16 %v130
    %v394 = vunpack.c.l.b16 %v131
    %v395 = vunpack.c.h.b16 %v131
    %v396 = vunpack.c.l.b16 %v132
    %v397 = vunpack.c.h.b16 %v132
    %v398 = vunpack.c.l.b16 %v133
    %v399 = vunpack.c.h.b16 %v133
    %v400 = vunpack.c.l.b16 %v134
    %v401 = vunpack.c.h.b16 %v134
    %v402 = vunpack.c.l.b16 %v135
    %v403 = vunpack.c.h.b16 %v135
    %v404 = vunpack.c.l.b16 %v136
    %v405 = vunpack.c.h.b16 %v136
    %v406 = vunpack.c.l.b16 %v137
    %v407 = vunpack.c.h.b16 %v137
    %v408 = vunpack.c.l.b16 %v138
    %v409 = vunpack.c.h.b16 %v138
    %v410 = vunpack.c.l.b16 %v139
    %v411 = vunpack.c.h.b16 %v139
    %v412 = vunpack.c.l.b16 %v140
    %v413 = vunpack.c.h.b16 %v140
    %v414 = vunpack.c.l.b16 %v141
    %v415 = vunpack.c.h.b16 %v141
    %v416 = vunpack.c.l.b16 %v142
    %v417 = vunpack.c.h.b16 %v142
    %v418 = vunpack.c.l.b16 %v143
    %v419 = vunpack.c.h.b16 %v143
    %v420 = vunpack.c.l.b16 %v144
    %v421 = vunpack.c.h.b16 %v144
    %v422 = vunpack.c.l.b16 %v145
    %v423 = vunpack.c.h.b16 %v145
    %v424 = vunpack.c.l.b16 %v146
    %v425 = vunpack.c.h.b16 %v146
    %v426 = vunpack.c.l.b16 %v147
    %v427 = vunpack.c.h.b16 %v147
    %v428 = vunpack.c.l.b16 %v148
    %v429 = vunpack.c.h.b16 %v148
    %v430 = vunpack.c.l.b16 %v149
    %v431 = vunpack.c.h.b16 %v149
    %v432 = vunpack.c.l.b16 %v150
    %v433 = vunpack.c.h.b16 %v150
    %v434 = vunpack.c.l.b16 %v151
    %v435 = vunpack.c.h.b16 %v151
    %v436 = vunpack.c.l.b16 %v152
    %v437 = vunpack.c.h.b16 %v152
    %v438 = vunpack.c.l.b16 %v153
    %v439 = vunpack.c.h.b16 %v153
    %v440 = vunpack.c.l.b16 %v154
    %v441 = vunpack.c.h.b16 %v154
    %v442 = vunpack.c.l.b16 %v155
    %v443 = vunpack.c.h.b16 %v155
    %v444 = vunpack.c.l.b16 %v156
    %v445 = vunpack.c.h.b16 %v156
    %v446 = vunpack.c.l.b16 %v157
    %v447 = vunpack.c.h.b16 %v157
    %v448 = vunpack.c.l.b16 %v158
    %v449 = vunpack.c.h.b16 %v158
    %v450 = vunpack.c.l.b16 %v159
    %v451 = vunpack.c.h.b16 %v159
    %v452 = vunpack.c.l.b16 %v160
    %v453 = vunpack.c.h.b16 %v160
    %v454 = vunpack.c.l.b16 %v161
    %v455 = vunpack.c.h.b16 %v161
    %v456 = vunpack.c.l.b16 %v162
    %v457 = vunpack.c.h.b16 %v162
    %v458 = vunpack.c.l.b16 %v163
    %v459 = vunpack.c.h.b16 %v163
    %v460 = vunpack.c.l.b16 %v164
    %v461 = vunpack.c.h.b16 %v164
    %v462 = vunpack.c.l.b16 %v165
    %v463 = vunpack.c.h.b16 %v165
    %v464 = vunpack.c.l.b16 %v166
    %v465 = vunpack.c.h.b16 %v166
    %v466 = vunpack.c.l.b16 %v167
    %v467 = vunpack.c.h.b16 %v167
    %v468 = vpack.c.b16 %v278, %v276
    %v469 = vpack.c.b16 %v279, %v277
    %v470 = vpack.c.b16 %v282, %v280
    %v471 = vpack.c.b16 %v283, %v281
    %v472 = vpack.c.b16 %v286, %v284
    %v473 = vpack.c.b16 %v287, %v285
    %v474 = vpack.c.b16 %v290, %v288
    %v475 = vpack.c.b16 %v291, %v289
    %v476 = vpack.c.b16 %v294, %v292
    %v477 = vpack.c.b16 %v295, %v293
    %v478 = vpack.c.b16 %v298, %v296
    %v479 = vpack.c.b16 %v299, %v297
    %v480 = vpack.c.b16 %v302, %v300
    %v481 = vpack.c.b16 %v303, %v301
    %v482 = vpack.c.b16 %v306, %v304
    %v483 = vpack.c.b16 %v307, %v305
    %v484 = vpack.c.b16 %v310, %v308
    %v485 = vpack.c.b16 %v311, %v309
    %v486 = vpack.c.b16 %v314, %v312
    %v487 = vpack.c.b16 %v315, %v313
    %v488 = vpack.c.b16 %v318, %v316
    %v489 = vpack.c.b16 %v319, %v317
    %v490 = vpack.c.b16 %v322, %v320
    %v491 = vpack.c.b16 %v323, %v321
    %v492 = vpack.c.b16 %v326, %v324
    %v493 = vpack.c.b16 %v327, %v325
    %v494 = vpack.c.b16 %v330, %v328
    %v495 = vpack.c.b16 %v331, %v329
    %v496 = vpack.c.b16 %v334, %v332
    %v497 = vpack.c.b16 %v335, %v333
    %v498 = vpack.c.b16 %v338, %v336
    %v499 = vpack.c.b16 %v339, %v337
    %v500 = vpack.c.b16 %v342, %v340
    %v501 = vpack.c.b16 %v343, %v341
    %v502 = vpack.c.b16 %v346, %v344
    %v503 = vpack.c.b16 %v347, %v345
    %v504 = vpack.c.b16 %v350, %v348
    %v505 = vpack.c.b16 %v351, %v349
    %v506 = vpack.c.b16 %v354, %v352
    %v507 = vpack.c.b16 %v355, %v353
    %v508 = vpack.c.b16 %v358, %v356
    %v509 = vpack.c.b16 %v359, %v357
    %v510 = vpack.c.b16 %v362, %v360
    %v511 = vpack.c.b16 %v363, %v361
    %v512 = vpack.c.b16 %v366, %v364
    %v513 = vpack.c.b16 %v367, %v365
    %v514 = vpack.c.b16 %v370, %v368
    %v515 = vpack.c.b16 %v371, %v369
    %v516 = vpack.c.b16 %v374, %v372
    %v517 = vpack.c.b16 %v375, %v373
    %v518 = vpack.c.b16 %v378, %v376
    %v519 = vpack.c.b16 %v379, %v377
    %v520 = vpack.c.b16 %v382, %v380
    %v521 = vpack.c.b16 %v383, %v381
    %v522 = vpack.c.b16 %v386, %v384
    %v523 = vpack.c.b16 %v387, %v385
    %v524 = vpack.c.b16 %v390, %v388
    %v525 = vpack.c.b16 %v391, %v389
    %v526 = vpack.c.b16 %v394, %v392
    %v527 = vpack.c.b16 %v395, %v393
    %v528 = vpack.c.b16 %v398, %v396
    %v529 = vpack.c.b16 %v399, %v397
    %v530 = vpack.c.b16 %v402, %v400
    %v531 = vpack.c.b16 %v403, %v401
    %v532 = vpack.c.b16 %v406, %v404
    %v533 = vpack.c.b16 %v407, %v405
    %v534 = vpack.c.b16 %v410, %v408
    %v535 = vpack.c.b16 %v411, %v409
    %v536 = vpack.c.b16 %v414, %v412
    %v537 = vpack.c.b16 %v415, %v413
    %v538 = vpack.c.b16 %v418, %v416
    %v539 = vpack.c.b16 %v419, %v417
    %v540 = vpack.c.b16 %v422, %v420
    %v541 = vpack.c.b16 %v423, %v421
    %v542 = vpack.c.b16 %v426, %v424
    %v543 = vpack.c.b16 %v427, %v425
    %v544 = vpack.c.b16 %v430, %v428
    %v545 = vpack.c.b16 %v431, %v429
    %v546 = vpack.c.b16 %v434, %v432
    %v547 = vpack.c.b16 %v435, %v433
    %v548 = vpack.c.b16 %v438, %v436
    %v549 = vpack.c.b16 %v439, %v437
    %v550 = vpack.c.b16 %v442, %v440
    %v551 = vpack.c.b16 %v443, %v441
    %v552 = vpack.c.b16 %v446, %v444
    %v553 = vpack.c.b16 %v447, %v445
    %v554 = vpack.c.b16 %v450, %v448
    %v555 = vpack.c.b16 %v451, %v449
    %v556 = vpack.c.b16 %v454, %v452
    %v557 = vpack.c.b16 %v455, %v453
    %v558 = vpack.c.b16 %v458, %v456
    %v559 = vpack.c.b16 %v459, %v457
    %v560 = vpack.c.b16 %v462, %v460
    %v561 = vpack.c.b16 %v463, %v461
    %v562 = vpack.c.b16 %v466, %v464
    %v563 = vpack.c.b16 %v467, %v465
    %660 = vmatprep.subr.bf16.mxu0 %v483
    %661 = vmatpush1.bf16.msra.mxu0 %v482
    %662 = vmatprep.subr.bf16.mxu0 %v481
    %663 = vmatpush1.bf16.msra.mxu0 %v480
    %664 = vmatprep.subr.bf16.mxu0 %v479
    %665 = vmatpush1.bf16.msra.mxu0 %v478
    %666 = vmatprep.subr.bf16.mxu0 %v477
    %667 = vmatpush1.bf16.msra.mxu0 %v476
    %668 = vmatprep.subr.bf16.mxu0 %v475
    %669 = vmatpush1.bf16.msra.mxu0 %v474
    %670 = vmatprep.subr.bf16.mxu0 %v473
    %671 = vmatpush1.bf16.msra.mxu0 %v472
    %672 = vmatprep.subr.bf16.mxu0 %v471
    %673 = vmatpush1.bf16.msra.mxu0 %v470
    %674 = vmatprep.subr.bf16.mxu0 %v469
    %675 = vmatpush1.bf16.msra.mxu0 %v468
    %676 = vmatprep.subr.bf16.mxu0 %v499
    %677 = vmatpush2.bf16.msra.mxu0 %v498
    %678 = vmatprep.subr.bf16.mxu0 %v497
    %679 = vmatpush2.bf16.msra.mxu0 %v496
    %680 = vmatprep.subr.bf16.mxu0 %v495
    %681 = vmatpush2.bf16.msra.mxu0 %v494
    %682 = vmatprep.subr.bf16.mxu0 %v493
    %683 = vmatpush2.bf16.msra.mxu0 %v492
    %684 = vmatprep.subr.bf16.mxu0 %v491
    %685 = vmatpush2.bf16.msra.mxu0 %v490
    %686 = vmatprep.subr.bf16.mxu0 %v489
    %687 = vmatpush2.bf16.msra.mxu0 %v488
    %688 = vmatprep.subr.bf16.mxu0 %v487
    %689 = vmatpush2.bf16.msra.mxu0 %v486
    %690 = vmatprep.subr.bf16.mxu0 %v485
    %691 = vmatpush2.bf16.msra.mxu0 %v484
    %692 = vmatprep.mubr.bf16.mxu0 %v67
    %693 = vmatmul.mubr.bf16.gmra.mxu0 %v66
    %v694 = vpop.f32.mrf.mxu0
    %v695 = vadd.f32 %v173, %v694
    %v696 = vpop.f32.mrf.mxu0
    %v697 = vadd.f32 %v177, %v696
    %v698 = vpop.f32.mrf.mxu0
    %v699 = vpop.f32.mrf.mxu0
    %700 = vdwg.mxu0
    %701 = vmatprep.subr.bf16.mxu0 %v515
    %702 = vmatpush1.bf16.msra.mxu0 %v514
    %703 = vmatprep.subr.bf16.mxu0 %v513
    %704 = vmatpush1.bf16.msra.mxu0 %v512
    %705 = vmatprep.subr.bf16.mxu0 %v511
    %706 = vmatpush1.bf16.msra.mxu0 %v510
    %707 = vmatprep.subr.bf16.mxu0 %v509
    %708 = vmatpush1.bf16.msra.mxu0 %v508
    %709 = vmatprep.subr.bf16.mxu0 %v507
    %710 = vmatpush1.bf16.msra.mxu0 %v506
    %711 = vmatprep.subr.bf16.mxu0 %v505
    %712 = vmatpush1.bf16.msra.mxu0 %v504
    %713 = vmatprep.subr.bf16.mxu0 %v503
    %714 = vmatpush1.bf16.msra.mxu0 %v502
    %715 = vmatprep.subr.bf16.mxu0 %v501
    %716 = vmatpush1.bf16.msra.mxu0 %v500
    %717 = vmatprep.subr.bf16.mxu0 %v531
    %718 = vmatpush2.bf16.msra.mxu0 %v530
    %719 = vmatprep.subr.bf16.mxu0 %v529
    %720 = vmatpush2.bf16.msra.mxu0 %v528
    %721 = vmatprep.subr.bf16.mxu0 %v527
    %722 = vmatpush2.bf16.msra.mxu0 %v526
    %723 = vmatprep.subr.bf16.mxu0 %v525
    %724 = vmatpush2.bf16.msra.mxu0 %v524
    %725 = vmatprep.subr.bf16.mxu0 %v523
    %726 = vmatpush2.bf16.msra.mxu0 %v522
    %727 = vmatprep.subr.bf16.mxu0 %v521
    %728 = vmatpush2.bf16.msra.mxu0 %v520
    %729 = vmatprep.subr.bf16.mxu0 %v519
    %730 = vmatpush2.bf16.msra.mxu0 %v518
    %731 = vmatprep.subr.bf16.mxu0 %v517
    %732 = vmatpush2.bf16.msra.mxu0 %v516
    %733 = vmatprep.mubr.bf16.mxu0 %v69
    %734 = vmatmul.mubr.bf16.gmra.mxu0 %v68
    %v735 = vpop.f32.mrf.mxu0
    %v736 = vadd.f32 %v695, %v735
    %v737 = vpop.f32.mrf.mxu0
    %v738 = vadd.f32 %v697, %v737
    %v739 = vpop.f32.mrf.mxu0
    %v740 = vpop.f32.mrf.mxu0
    %741 = vdwg.mxu0
    %742 = vmatprep.subr.bf16.mxu0 %v547
    %743 = vmatpush1.bf16.msra.mxu0 %v546
    %744 = vmatprep.subr.bf16.mxu0 %v545
    %745 = vmatpush1.bf16.msra.mxu0 %v544
    %746 = vmatprep.subr.bf16.mxu0 %v543
    %747 = vmatpush1.bf16.msra.mxu0 %v542
    %748 = vmatprep.subr.bf16.mxu0 %v541
    %749 = vmatpush1.bf16.msra.mxu0 %v540
    %750 = vmatprep.subr.bf16.mxu0 %v539
    %751 = vmatpush1.bf16.msra.mxu0 %v538
    %752 = vmatprep.subr.bf16.mxu0 %v537
    %753 = vmatpush1.bf16.msra.mxu0 %v536
    %754 = vmatprep.subr.bf16.mxu0 %v535
    %755 = vmatpush1.bf16.msra.mxu0 %v534
    %756 = vmatprep.subr.bf16.mxu0 %v533
    %757 = vmatpush1.bf16.msra.mxu0 %v532
    %758 = vmatprep.subr.bf16.mxu0 %v563
    %759 = vmatpush2.bf16.msra.mxu0 %v562
    %760 = vmatprep.subr.bf16.mxu0 %v561
    %761 = vmatpush2.bf16.msra.mxu0 %v560
    %762 = vmatprep.subr.bf16.mxu0 %v559
    %763 = vmatpush2.bf16.msra.mxu0 %v558
    %764 = vmatprep.subr.bf16.mxu0 %v557
    %765 = vmatpush2.bf16.msra.mxu0 %v556
    %766 = vmatprep.subr.bf16.mxu0 %v555
    %767 = vmatpush2.bf16.msra.mxu0 %v554
    %768 = vmatprep.subr.bf16.mxu0 %v553
    %769 = vmatpush2.bf16.msra.mxu0 %v552
    %770 = vmatprep.subr.bf16.mxu0 %v551
    %771 = vmatpush2.bf16.msra.mxu0 %v550
    %772 = vmatprep.subr.bf16.mxu0 %v549
    %773 = vmatpush2.bf16.msra.mxu0 %v548
    %774 = vmatprep.mubr.bf16.mxu0 %v71
    %775 = vmatmul.mubr.bf16.gmra.mxu0 %v70
    %v776 = vpop.f32.mrf.mxu0
    %v777 = vadd.f32 %v736, %v776
    %v778 = vpop.f32.mrf.mxu0
    %v779 = vadd.f32 %v738, %v778
    %v780 = vpop.f32.mrf.mxu0
    %v781 = vpop.f32.mrf.mxu0
    %782 = vdwg.mxu0
    %v783 = vmax.f32 %v777, 0.0
    %v784 = vmax.f32 %v779, 0.0
    %v785 = vpack.c.bf16 %v783, %v783
    %v786 = vpack.c.bf16 %v784, %v784
    %v787 = vld [vmem:[#allocation6] sm:$0xf]
    %v788 = vld [vmem:[#allocation6 + $0x4] sm:$0xf]
    %v789 = vld [vmem:[#allocation6 + $0x8] sm:$0xf]
    %v790 = vld [vmem:[#allocation6 + $0xc] sm:$0xf]
    %v791 = vld [vmem:[#allocation6 + $0x10] sm:$0xf]
    %v792 = vld [vmem:[#allocation6 + $0x14] sm:$0xf]
    %v793 = vld [vmem:[#allocation6 + $0x18] sm:$0xf]
    %v794 = vld [vmem:[#allocation6 + $0x1c] sm:$0xf]
    %v795 = vld [vmem:[#allocation6 + $0x20] sm:$0xf]
    %v796 = vld [vmem:[#allocation6 + $0x24] sm:$0xf]
    %v797 = vld [vmem:[#allocation6 + $0x28] sm:$0xf]
    %v798 = vld [vmem:[#allocation6 + $0x2c] sm:$0xf]
    %v799 = vld [vmem:[#allocation6 + $0x30] sm:$0xf]
    %v800 = vld [vmem:[#allocation6 + $0x34] sm:$0xf]
    %v801 = vld [vmem:[#allocation6 + $0x38] sm:$0xf]
    %v802 = vld [vmem:[#allocation6 + $0x3c] sm:$0xf]
    %v803 = vld [vmem:[#allocation6 + $0x40] sm:$0xf]
    %v804 = vld [vmem:[#allocation6 + $0x44] sm:$0xf]
    %v805 = vld [vmem:[#allocation6 + $0x48] sm:$0xf]
    %v806 = vld [vmem:[#allocation6 + $0x4c] sm:$0xf]
    %v807 = vld [vmem:[#allocation6 + $0x50] sm:$0xf]
    %v808 = vld [vmem:[#allocation6 + $0x54] sm:$0xf]
    %v809 = vld [vmem:[#allocation6 + $0x58] sm:$0xf]
    %v810 = vld [vmem:[#allocation6 + $0x5c] sm:$0xf]
    %v811 = vld [vmem:[#allocation6 + $0x60] sm:$0xf]
    %v812 = vld [vmem:[#allocation6 + $0x64] sm:$0xf]
    %v813 = vld [vmem:[#allocation6 + $0x68] sm:$0xf]
    %v814 = vld [vmem:[#allocation6 + $0x6c] sm:$0xf]
    %v815 = vld [vmem:[#allocation6 + $0x70] sm:$0xf]
    %v816 = vld [vmem:[#allocation6 + $0x74] sm:$0xf]
    %v817 = vld [vmem:[#allocation6 + $0x78] sm:$0xf]
    %v818 = vld [vmem:[#allocation6 + $0x7c] sm:$0xf]
    %v819 = vld [vmem:[%s4] sm:$0x1]
    %v821 = vlaneseq
    %v822 = vshrl.u32 %v821, 7
    %v823 = vsub.s32 0, %v822
    %v824 = vrot.slane %v819, %v823
    %v858 = vunpack.c.l.b16 %v787
    %v859 = vunpack.c.l.b16 %v788
    %v860 = vunpack.c.l.b16 %v789
    %v861 = vunpack.c.l.b16 %v790
    %v862 = vunpack.c.l.b16 %v791
    %v863 = vunpack.c.l.b16 %v792
    %v864 = vunpack.c.l.b16 %v793
    %v865 = vunpack.c.l.b16 %v794
    %v866 = vunpack.c.l.b16 %v795
    %v867 = vunpack.c.l.b16 %v796
    %v868 = vunpack.c.l.b16 %v797
    %v869 = vunpack.c.l.b16 %v798
    %v870 = vunpack.c.l.b16 %v799
    %v871 = vunpack.c.l.b16 %v800
    %v872 = vunpack.c.l.b16 %v801
    %v873 = vunpack.c.l.b16 %v802
    %v874 = vunpack.c.l.b16 %v803
    %v875 = vunpack.c.l.b16 %v804
    %v876 = vunpack.c.l.b16 %v805
    %v877 = vunpack.c.l.b16 %v806
    %v878 = vunpack.c.l.b16 %v807
    %v879 = vunpack.c.l.b16 %v808
    %v880 = vunpack.c.l.b16 %v809
    %v881 = vunpack.c.l.b16 %v810
    %v882 = vunpack.c.l.b16 %v811
    %v883 = vunpack.c.l.b16 %v812
    %v884 = vunpack.c.l.b16 %v813
    %v885 = vunpack.c.l.b16 %v814
    %v886 = vunpack.c.l.b16 %v815
    %v887 = vunpack.c.l.b16 %v816
    %v888 = vunpack.c.l.b16 %v817
    %v889 = vunpack.c.l.b16 %v818
    %v890 = vpack.c.b16 %v859, %v858
    %v891 = vpack.c.b16 %v861, %v860
    %v892 = vpack.c.b16 %v863, %v862
    %v893 = vpack.c.b16 %v865, %v864
    %v894 = vpack.c.b16 %v867, %v866
    %v895 = vpack.c.b16 %v869, %v868
    %v896 = vpack.c.b16 %v871, %v870
    %v897 = vpack.c.b16 %v873, %v872
    %v898 = vpack.c.b16 %v875, %v874
    %v899 = vpack.c.b16 %v877, %v876
    %v900 = vpack.c.b16 %v879, %v878
    %v901 = vpack.c.b16 %v881, %v880
    %v902 = vpack.c.b16 %v883, %v882
    %v903 = vpack.c.b16 %v885, %v884
    %v904 = vpack.c.b16 %v887, %v886
    %v905 = vpack.c.b16 %v889, %v888
    %922 = vmatprep.subr.bf16.mxu0 0
    %923 = vmatpush1.bf16.msra.mxu0 %v897
    %924 = vmatprep.subr.bf16.mxu0 0
    %925 = vmatpush1.bf16.msra.mxu0 %v896
    %926 = vmatprep.subr.bf16.mxu0 0
    %927 = vmatpush1.bf16.msra.mxu0 %v895
    %928 = vmatprep.subr.bf16.mxu0 0
    %929 = vmatpush1.bf16.msra.mxu0 %v894
    %930 = vmatprep.subr.bf16.mxu0 0
    %931 = vmatpush1.bf16.msra.mxu0 %v893
    %932 = vmatprep.subr.bf16.mxu0 0
    %933 = vmatpush1.bf16.msra.mxu0 %v892
    %934 = vmatprep.subr.bf16.mxu0 0
    %935 = vmatpush1.bf16.msra.mxu0 %v891
    %936 = vmatprep.subr.bf16.mxu0 0
    %937 = vmatpush1.bf16.msra.mxu0 %v890
    %938 = vmatprep.subr.bf16.mxu0 0
    %939 = vmatpush2.bf16.msra.mxu0 %v905
    %940 = vmatprep.subr.bf16.mxu0 0
    %941 = vmatpush2.bf16.msra.mxu0 %v904
    %942 = vmatprep.subr.bf16.mxu0 0
    %943 = vmatpush2.bf16.msra.mxu0 %v903
    %944 = vmatprep.subr.bf16.mxu0 0
    %945 = vmatpush2.bf16.msra.mxu0 %v902
    %946 = vmatprep.subr.bf16.mxu0 0
    %947 = vmatpush2.bf16.msra.mxu0 %v901
    %948 = vmatprep.subr.bf16.mxu0 0
    %949 = vmatpush2.bf16.msra.mxu0 %v900
    %950 = vmatprep.subr.bf16.mxu0 0
    %951 = vmatpush2.bf16.msra.mxu0 %v899
    %952 = vmatprep.subr.bf16.mxu0 0
    %953 = vmatpush2.bf16.msra.mxu0 %v898
    %954 = vmatprep.mubr.bf16.mxu0 %v786
    %955 = vmatmul.mubr.bf16.gmra.mxu0 %v785
    %v956 = vpop.f32.mrf.mxu0
    %v957 = vadd.f32 %v824, %v956
    %v958 = vpop.f32.mrf.mxu0
    %v959 = vpop.f32.mrf.mxu0
    %v960 = vpop.f32.mrf.mxu0
    %961 = vdwg.mxu0
    %962 = vmax.xlane.f32.xlu0 %v957
    %v963 = vpop.xlane.xlu0 %962
    %v964 = vsub.f32 %v957, %v963
    %v965 = vmul.f32 %v964, 1.442695
    %v966 = vpow.pop %v965
    %967 = vadd.xlane.f32.xlu0 %v966
    %v968 = vpop.xlane.xlu0 %967
    %v969 = vrcp.pop %v968
    %v970 = vmul.f32 %v966, %v969
    %v971 = vpack.c.bf16 %v970, %v970
    %972 = vst [vmem:[%s5] sm:$0xf] %v971
    // Predicated region
    $region34: #{net_forward.1} parent=1 // pred_check
      _
    $region35: #{net_forward.1} parent=1 // pred_check_branch
      %974 = sbr.rel (0) target = $region37
    $region36: #{net_forward.1} parent=1 // pred_region
      _
    $region37: #{net_forward.1} parent=1 // pred_fallthru
      _
    // Predicated region
    $region38: #{net_forward.1} parent=1 // pred_check
      _
    $region39: #{net_forward.1} parent=1 // pred_check_branch
      %976 = sbr.rel (0) target = $region41
    $region40: #{net_forward.1} parent=1 // pred_region
      _
    $region41: #{net_forward.1} parent=1 // pred_fallthru
      _
    %977 = vsyncpa [#allocation3], 1
    %978 = vsyncpa [#allocation5], 1

</llo_original>
